<compile_context>
chip_gen: v5e
topology: v5e:2x2
jax: 0.10.0
libtpu: 0.0.40
codegen_flags: <defaults>
</compile_context>

<pallas_src>
import jax
import jax.numpy as jnp
from jax.experimental import pallas as pl
from jax.experimental.pallas import tpu as pltpu

EPS = 1e-5                      # PyTorch BatchNorm2d default eps
_VMEM_LIMIT = 32 * 1024 * 1024  # safe on v5e/v6e (128 MiB) and v7x (64 MiB)


def _round_up(v, m):
    return (v + m - 1) // m * m


# ----------------------------- phase 1 ------------------------------------
def _conv_stats_kernel(p_ref, w_ref, y_ref, sum_ref, sq_ref):
    """ReLU + conv-as-matmul + per-channel partial BN statistics (one pass)."""
    # relu(im2col(x)) == im2col(relu(x)); elementwise on the VPU.
    p = jnp.maximum(p_ref[...], 0)                                  # [K, TILE_M]
    # Conv2d == one MXU matmul in the transposed (lane-dense) layout.
    y = jnp.dot(w_ref[...], p, preferred_element_type=jnp.float32)  # [C_out, TILE_M]
    y_ref[...] = y
    # Per-channel partial sum / sum-of-squares (var = E[y^2] - mean^2 later).
    sum_ref[...] = jnp.sum(y, axis=1)[None, :]                      # [1, C_out]
    sq_ref[...] = jnp.sum(y * y, axis=1)[None, :]                   # [1, C_out]


# ----------------------------- phase 2 ------------------------------------
def _bn_apply_kernel(y_ref, scale_ref, bias_ref, o_ref):
    """Apply folded per-channel scale/bias: (y - mean)/std*gamma + beta."""
    o_ref[...] = y_ref[...] * scale_ref[...] + bias_ref[...]


def down_block(x, weight, gamma, beta, *, matmul_dtype=jnp.float32):
    """x: [N, C_in, H, W] (NCHW), weight: [C_out, C_in, 4, 4], gamma/beta: [C_out].

    matmul_dtype=jnp.bfloat16 halves the patches HBM traffic and doubles MXU
    throughput (f32 accumulation kept); default f32 matches PyTorch numerics.
    """
    n, c_in, h, w = x.shape
    c_out = weight.shape[0]
    ho = (h + 2 - 4) // 2 + 1
    wo = (w + 2 - 4) // 2 + 1
    m = n * ho * wo
    k = c_in * 16

    # ---- glue: im2col patch extraction, directly in transposed [K, M] ----
    # TODO(synk): assemble the 16 conv taps inside the kernel from an NHWC x
    # ref (memory_space=pl.ANY + manual DMA) to avoid the 4x im2col HBM blow-up.
    xp = jnp.pad(x, ((0, 0), (0, 0), (1, 1), (1, 1)))
    cols = []
    for kh in range(4):
        for kw in range(4):
            cols.append(xp[:, :, kh:kh + 2 * ho:2, kw:kw + 2 * wo:2])  # [N,C_in,Ho,Wo]
    patches = jnp.stack(cols, axis=2)                    # [N, C_in, 16, Ho, Wo]
    patches_t = patches.transpose(1, 2, 0, 3, 4).reshape(k, m)         # [K, M]

    # Weight OIHW -> [C_out, K]; K order (c_in, kh, kw) matches patches_t.
    w_t = weight.reshape(c_out, k)

    # ---- M tiling: multiple of 128, up to 512 rows per tile ----
    m_pad = _round_up(m, 128)
    tile_m = 128
    for cand in (512, 384, 256):
        if m_pad % cand == 0:
            tile_m = cand
            break
    num_tiles = m_pad // tile_m
    if m_pad != m:
        patches_t = jnp.pad(patches_t, ((0, 0), (0, m_pad - m)))

    patches_t = patches_t.astype(matmul_dtype)
    w_t = w_t.astype(matmul_dtype)
    # Note: K / C_out are left unpadded; padding K to 128 would double the
    # hot patches stream for small C_in, and Mosaic pads the MXU feed anyway.

    cparams = pltpu.CompilerParams(
        dimension_semantics=("parallel",),
        vmem_limit_bytes=_VMEM_LIMIT,
    )

    # ---- phase 1: ReLU + conv matmul + partial BN stats, tiled over M ----
    y, psum, psq = pl.pallas_call(
        _conv_stats_kernel,
        out_shape=(
            jax.ShapeDtypeStruct((c_out, m_pad), jnp.float32),
            jax.ShapeDtypeStruct((num_tiles, c_out), jnp.float32),
            jax.ShapeDtypeStruct((num_tiles, c_out), jnp.float32),
        ),
        grid=(num_tiles,),
        in_specs=[
            pl.BlockSpec((k, tile_m), lambda i: (0, i)),      # patches_T tile
            pl.BlockSpec((c_out, k), lambda i: (0, 0)),       # weight (resident)
        ],
        out_specs=(
            pl.BlockSpec((c_out, tile_m), lambda i: (0, i)),  # y tile (lane-dense)
            pl.BlockSpec((1, c_out), lambda i: (i, 0)),       # partial sums
            pl.BlockSpec((1, c_out), lambda i: (i, 0)),       # partial sum-of-squares
        ),
        compiler_params=cparams,
    )(patches_t, w_t)

    # ---- finalize BN statistics (tiny, per-channel, in f32) ----
    mean = jnp.sum(psum, axis=0) / m                       # true M, not padded
    var = jnp.sum(psq, axis=0) / m - mean * mean           # biased variance
    scale = gamma.astype(jnp.float32) * jax.lax.rsqrt(var + EPS)
    bias = beta.astype(jnp.float32) - mean * scale

    # ---- phase 2: apply folded scale/bias over y tiles (in-place on y) ----
    out_t = pl.pallas_call(
        _bn_apply_kernel,
        out_shape=jax.ShapeDtypeStruct((c_out, m_pad), jnp.float32),
        grid=(num_tiles,),
        in_specs=[
            pl.BlockSpec((c_out, tile_m), lambda i: (0, i)),
            pl.BlockSpec((c_out, 1), lambda i: (0, 0)),
            pl.BlockSpec((c_out, 1), lambda i: (0, 0)),
        ],
        out_specs=pl.BlockSpec((c_out, tile_m), lambda i: (0, i)),
        compiler_params=cparams,
        input_output_aliases={0: 0},                       # reuse y's HBM buffer
    )(y, scale.reshape(c_out, 1), bias.reshape(c_out, 1))

    # [C_out, M_pad] -> drop pad -> [C_out, N, Ho, Wo] -> NCHW
    out_t = out_t[:, :m]
    return out_t.reshape(c_out, n, ho, wo).transpose(1, 0, 2, 3)


def reference(x, weight, gamma, beta):
    """Pure-JAX reference of the PyTorch forward (for verification)."""
    a = jnp.maximum(x, 0.0)
    y = jax.lax.conv_general_dilated(
        a, weight, window_strides=(2, 2), padding=((1, 1), (1, 1)),
        dimension_numbers=("NCHW", "OIHW", "NCHW"))
    mean = jnp.mean(y, axis=(0, 2, 3), keepdims=True)
    var = jnp.mean((y - mean) ** 2, axis=(0, 2, 3), keepdims=True)
    return (y - mean) * jax.lax.rsqrt(var + EPS) * gamma.reshape(1, -1, 1, 1) \
        + beta.reshape(1, -1, 1, 1)


if __name__ == "__main__":
    key = jax.random.PRNGKey(0)
    k_x, k_w, k_g, k_b = jax.random.split(key, 4)

    N, C_IN, C_OUT, H, W = 2, 4, 8, 16, 16

    x = jax.random.normal(k_x, (N, C_IN, H, W), dtype=jnp.float32)
    weight = 0.1 * jax.random.normal(k_w, (C_OUT, C_IN, 4, 4), dtype=jnp.float32)
    gamma = 1.0 + 0.1 * jax.random.normal(k_g, (C_OUT,), dtype=jnp.float32)
    beta = 0.1 * jax.random.normal(k_b, (C_OUT,), dtype=jnp.float32)

    out = jax.block_until_ready(down_block(x, weight, gamma, beta))
    ref = jax.block_until_ready(reference(x, weight, gamma, beta))

    assert out.shape == (N, C_OUT, H // 2, W // 2), out.shape
    assert jnp.allclose(out, ref, atol=2e-4, rtol=2e-4), \
        float(jnp.max(jnp.abs(out - ref)))

    print("KERNEL_OK")
</pallas_src>

<mosaic_0001>
module attributes {stable_mosaic.version = 11 : i64} {
  func.func @_conv_stats_kernel(%arg0: i32, %arg1: memref<64x128xf32, #tpu.memory_space<vmem>>, %arg2: memref<8x64xf32, #tpu.memory_space<vmem>>, %arg3: memref<8x128xf32, #tpu.memory_space<vmem>>, %arg4: memref<1x8xf32, #tpu.memory_space<vmem>>, %arg5: memref<1x8xf32, #tpu.memory_space<vmem>>) attributes {dimension_semantics = [#tpu.dimension_semantics<parallel>], iteration_bounds = array<i64: 1>, scalar_prefetch = 0 : i64, scratch_operands = 0 : i64, tpu.core_type = #tpu.core_type<tc>, window_params = [{transform_indices = @transform_0, window_bounds = array<i64: 64, 128>}, {pipeline_mode = #tpu.pipeline_mode<synchronous>, transform_indices = @transform_1, window_bounds = array<i64: 8, 64>}, {transform_indices = @transform_2, window_bounds = array<i64: 8, 128>}, {transform_indices = @transform_3, window_bounds = array<i64: 1, 8>}, {transform_indices = @transform_4, window_bounds = array<i64: 1, 8>}]} {
    %c0 = arith.constant 0 : index
    %c0_0 = arith.constant 0 : index
    %0 = vector.load %arg1[%c0, %c0_0] : memref<64x128xf32, #tpu.memory_space<vmem>>, vector<64x128xf32>
    %cst = arith.constant 0.000000e+00 : f32
    %1 = vector.broadcast %cst : f32 to vector<64x128xf32>
    %2 = arith.maximumf %0, %1 : vector<64x128xf32>
    %c0_1 = arith.constant 0 : index
    %c0_2 = arith.constant 0 : index
    %3 = vector.load %arg2[%c0_1, %c0_2] : memref<8x64xf32, #tpu.memory_space<vmem>>, vector<8x64xf32>
    %cst_3 = arith.constant dense<0.000000e+00> : vector<8x128xf32>
    %4 = tpu.matmul %3, %2, %cst_3 {dimension_numbers = #tpu.dot_dimension_numbers<[1], [0], [0], [1], [0, 0, 1, 1], [], []>} : vector<8x64xf32>, vector<64x128xf32>, vector<8x128xf32> -> vector<8x128xf32>
    %c0_4 = arith.constant 0 : index
    %c0_5 = arith.constant 0 : index
    %5 = vector.load %arg3[%c0_4, %c0_5] : memref<8x128xf32, #tpu.memory_space<vmem>>, vector<8x128xf32>
    tpu.vector_store %arg3[%c0_4, %c0_5], %4 {strides = array<i32>} : memref<8x128xf32, #tpu.memory_space<vmem>>, vector<8x128xf32>,
    %cst_6 = arith.constant dense<0.000000e+00> : vector<8xf32>
    %6 = vector.multi_reduction <add>, %4, %cst_6 [1] : vector<8x128xf32> to vector<8xf32>
    %7 = vector.shape_cast %6 : vector<8xf32> to vector<1x8xf32>
    %c0_7 = arith.constant 0 : index
    %c0_8 = arith.constant 0 : index
    %8 = vector.load %arg4[%c0_7, %c0_8] : memref<1x8xf32, #tpu.memory_space<vmem>>, vector<1x8xf32>
    tpu.vector_store %arg4[%c0_7, %c0_8], %7 {strides = array<i32>} : memref<1x8xf32, #tpu.memory_space<vmem>>, vector<1x8xf32>,
    %9 = arith.mulf %4, %4 : vector<8x128xf32>
    %cst_9 = arith.constant dense<0.000000e+00> : vector<8xf32>
    %10 = vector.multi_reduction <add>, %9, %cst_9 [1] : vector<8x128xf32> to vector<8xf32>
    %11 = vector.shape_cast %10 : vector<8xf32> to vector<1x8xf32>
    %c0_10 = arith.constant 0 : index
    %c0_11 = arith.constant 0 : index
    %12 = vector.load %arg5[%c0_10, %c0_11] : memref<1x8xf32, #tpu.memory_space<vmem>>, vector<1x8xf32>
    tpu.vector_store %arg5[%c0_10, %c0_11], %11 {strides = array<i32>} : memref<1x8xf32, #tpu.memory_space<vmem>>, vector<1x8xf32>,
    return
  }
  func.func @transform_0(%arg0: i32) -> (i32, i32) {
    %c0_i32 = arith.constant 0 : i32
    %c0_i32_0 = arith.constant 0 : i32
    return %c0_i32, %arg0 : i32, i32
  }
  func.func @transform_1(%arg0: i32) -> (i32, i32) {
    %c0_i32 = arith.constant 0 : i32
    %c0_i32_0 = arith.constant 0 : i32
    %c0_i32_1 = arith.constant 0 : i32
    return %c0_i32, %c0_i32_0 : i32, i32
  }
  func.func @transform_2(%arg0: i32) -> (i32, i32) {
    %c0_i32 = arith.constant 0 : i32
    %c0_i32_0 = arith.constant 0 : i32
    return %c0_i32, %arg0 : i32, i32
  }
  func.func @transform_3(%arg0: i32) -> (i32, i32) {
    %c0_i32 = arith.constant 0 : i32
    %c0_i32_0 = arith.constant 0 : i32
    return %arg0, %c0_i32 : i32, i32
  }
  func.func @transform_4(%arg0: i32) -> (i32, i32) {
    %c0_i32 = arith.constant 0 : i32
    %c0_i32_0 = arith.constant 0 : i32
    return %arg0, %c0_i32 : i32, i32
  }
}

</mosaic_0001>

<llo_original>
// kernel: tpu_custom_call.1
$region0: #{tpu_custom_call.1}
  #allocation0 [shape = 'u32[]', space=smem, size = 0x4, offset = 0x4, fixed_abs, tag = 'smem constant byte address 0x4 - core index']
  #allocation1 [shape = 'u32[72,128]{1,0:T(1,128)}', space=vmem, size = 0x9000, scoped, tag = 'internal scratch']
  %s0 = inlined_call_operand.hbm [shape: f32[64,128], index: 0, kind: input, shape index: {}]
  %s1 = inlined_call_operand.hbm [shape: f32[8,64], index: 1, kind: input, shape index: {}]
  %s2 = inlined_call_operand.hbm [shape: f32[8,128], index: 2, kind: output, shape index: {0}]
  %s3 = inlined_call_operand.hbm [shape: f32[1,8], index: 3, kind: output, shape index: {1}]
  %s4 = inlined_call_operand.hbm [shape: f32[1,8], index: 4, kind: output, shape index: {2}]
  %5 = xla_tuple %s2, %s3, %s4
  %s6 = sld [smem:[#allocation0]]
  $region42: #{tpu_custom_call.1} parent=0
    _
  %s8 = ssub.s32 1, %s6
  %s9 = scalar_select 0, %s8, %s6
  $region1: #{tpu_custom_call.1} parent=0
    #allocation2 [shape = 'u8[32768]{0}', space=vmem, size = 0x8000, scoped, tag = 'input window, operand 0, single buffered']
    #allocation3 [shape = 's32[1]{0}', space=sflag, size = 0x4, scoped, tag = 'scoped memory for tpu_custom_call.1']
    #allocation4 [shape = 's32[1]{0}', space=sflag, size = 0x4, scoped, tag = 'scoped memory for tpu_custom_call.1']
    #allocation5 [shape = 'u8[4096]{0}', space=vmem, size = 0x1000, scoped, tag = 'input window, operand 1, single buffered']
    #allocation6 [shape = 's32[1]{0}', space=sflag, size = 0x4, scoped, tag = 'scoped memory for tpu_custom_call.1']
    #allocation7 [shape = 'u8[4096]{0}', space=vmem, size = 0x1000, scoped, tag = 'output window, operand 0, single buffered']
    #allocation8 [shape = 'u8[512]{0}', space=vmem, size = 0x400, scoped, tag = 'output window, operand 1, single buffered']
    #allocation9 [shape = 's32[1]{0}', space=sflag, size = 0x4, scoped, tag = 'scoped memory for tpu_custom_call.1']
    #allocation10 [shape = 'u8[512]{0}', space=vmem, size = 0x400, scoped, tag = 'output window, operand 2, single buffered']
    %10 = vsyncpa [#allocation3], 0
    %11 = vsyncpa [#allocation6], 0
    %12 = vsyncpa [#allocation4], 0
    %13 = vsyncpa [#allocation9], 0
    // Predicated region
    $region2: #{tpu_custom_call.1} parent=1 // pred_check
      _
    $region3: #{tpu_custom_call.1} parent=1 // pred_check_branch
      %15 = sbr.rel (0) target = $region5
    $region4: #{tpu_custom_call.1} parent=1 // pred_region
      %17 = vsyncadd [#allocation3], 0
      %s18 = sshll.u32 %s0, 4
      %s19 = int_to_ptr.hbm [resolvable:$true] %s18
      %s20 = sshll.u32 [#allocation2], 4
      %s21 = int_to_ptr.vmem [resolvable:$true] %s20
      %26 = dma.hbm_to_vmem [thread:$0]  %s19, 1024, %s21, [#allocation3], 128, 128, 8
    $region5: #{tpu_custom_call.1} parent=1 // pred_fallthru
      _
    // Predicated region
    $region6: #{tpu_custom_call.1} parent=1 // pred_check
      _
    $region7: #{tpu_custom_call.1} parent=1 // pred_check_branch
      %28 = sbr.rel (0) target = $region9
    $region8: #{tpu_custom_call.1} parent=1 // pred_region
      %30 = vsyncadd [#allocation6], 0
      %s32 = sshll.u32 %s1, 4
      %s33 = int_to_ptr.hbm [resolvable:$true] %s32
      %s34 = sshll.u32 [#allocation5], 4
      %s35 = int_to_ptr.vmem [resolvable:$true] %s34
      %37 = dma.hbm_to_vmem [thread:$0]  %s33, 128, %s35, [#allocation6]
    $region9: #{tpu_custom_call.1} parent=1 // pred_fallthru
      _
    // Predicated region
    $region10: #{tpu_custom_call.1} parent=1 // pred_check
      _
    $region11: #{tpu_custom_call.1} parent=1 // pred_check_branch
      %39 = sbr.rel (0) target = $region13
    $region12: #{tpu_custom_call.1} parent=1 // pred_region
      %41 = dma.done [#allocation3], 1024
    $region13: #{tpu_custom_call.1} parent=1 // pred_fallthru
      _
    // Predicated region
    $region14: #{tpu_custom_call.1} parent=1 // pred_check
      _
    $region15: #{tpu_custom_call.1} parent=1 // pred_check_branch
      %43 = sbr.rel (0) target = $region17
    $region16: #{tpu_custom_call.1} parent=1 // pred_region
      %45 = dma.done [#allocation6], 128
    $region17: #{tpu_custom_call.1} parent=1 // pred_fallthru
      _
    %v46 = vld [vmem:[#allocation2] sm:$0xff]
    %v47 = vld [vmem:[#allocation2 + $0x8] sm:$0xff]
    %v48 = vld [vmem:[#allocation2 + $0x10] sm:$0xff]
    %v49 = vld [vmem:[#allocation2 + $0x18] sm:$0xff]
    %v50 = vld [vmem:[#allocation2 + $0x20] sm:$0xff]
    %v51 = vld [vmem:[#allocation2 + $0x28] sm:$0xff]
    %v52 = vld [vmem:[#allocation2 + $0x30] sm:$0xff]
    %v53 = vld [vmem:[#allocation2 + $0x38] sm:$0xff]
    %v54 = vmax.f32 %v46, 0.0
    %v55 = vmax.f32 %v47, 0.0
    %v56 = vmax.f32 %v48, 0.0
    %v57 = vmax.f32 %v49, 0.0
    %v58 = vmax.f32 %v50, 0.0
    %v59 = vmax.f32 %v51, 0.0
    %v60 = vmax.f32 %v52, 0.0
    %v61 = vmax.f32 %v53, 0.0
    %v62 = vld [vmem:[#allocation5] sm:$0xff]
    %vm63 = vcmask 523264
    %v65 = vsel %vm63, %v62, 0
    %67 = vmatpush.msra.mxu0 0.0
    %68 = vmatpush.msra.mxu0 0.0
    %69 = vmatpush.msra.mxu0 0.0
    %70 = vmatpush.msra.mxu0 0.0
    %71 = vmatpush.msra.mxu0 0.0
    %72 = vmatpush.msra.mxu0 0.0
    %73 = vmatpush.msra.mxu0 0.0
    %74 = vmatpush.msra.mxu0 0.0
    %75 = vmatpush.msra.mxu0 %v61
    %76 = vmatpush.msra.mxu0 %v60
    %77 = vmatpush.msra.mxu0 %v59
    %78 = vmatpush.msra.mxu0 %v58
    %79 = vmatpush.msra.mxu0 %v57
    %80 = vmatpush.msra.mxu0 %v56
    %81 = vmatpush.msra.mxu0 %v55
    %82 = vmatpush.msra.mxu0 %v54
    %83 = vmatmul.f32.gmra.mxu0 %v65
    %v84 = vpop.f32.mrf.mxu0
    %v85 = vadd.f32 0.0, %v84
    %86 = vdwg.mxu0
    %87 = vst [vmem:[#allocation7] sm:$0xff] %v85
    %88 = vadd.xlane.f32.xlu0 %v85
    %v89 = vpop.xlane.xlu0 %88
    %v91 = vlaneseq
    %v92 = vand.u32 %v91, 127
    %v93 = vperm.slane %v89, %v92
    %vm95 = vcmask 57344
    %96 = vst.msk [vmem:[#allocation8] sm:$0x1] %vm95, %v93
    %v97 = vmul.f32 %v85, %v85
    %98 = vadd.xlane.f32.xlu0 %v97
    %v99 = vpop.xlane.xlu0 %98
    %v101 = vperm.slane %v99, %v92
    %103 = vst.msk [vmem:[#allocation10] sm:$0x1] %vm95, %v101
    // Predicated region
    $region18: #{tpu_custom_call.1} parent=1 // pred_check
      _
    $region19: #{tpu_custom_call.1} parent=1 // pred_check_branch
      %105 = sbr.rel (0) target = $region21
    $region20: #{tpu_custom_call.1} parent=1 // pred_region
      %107 = vsyncadd [#allocation4], 0
      %s109 = sshll.u32 [#allocation7], 4
      %s110 = int_to_ptr.vmem [resolvable:$true] %s109
      %s111 = sshll.u32 %s2, 4
      %s112 = int_to_ptr.hbm [resolvable:$true] %s111
      %114 = dma.vmem_to_hbm [thread:$0]  %s110, 128, %s112, [#allocation4]
    $region21: #{tpu_custom_call.1} parent=1 // pred_fallthru
      _
    // Predicated region
    $region22: #{tpu_custom_call.1} parent=1 // pred_check
      _
    $region23: #{tpu_custom_call.1} parent=1 // pred_check_branch
      %116 = sbr.rel (0) target = $region25
    $region24: #{tpu_custom_call.1} parent=1 // pred_region
      %118 = vsyncadd [#allocation9], 0
      %s120 = sshll.u32 [#allocation8], 4
      %s121 = int_to_ptr.vmem [resolvable:$true] %s120
      %s122 = sshll.u32 %s3, 4
      %s123 = int_to_ptr.hbm [resolvable:$true] %s122
      %125 = dma.vmem_to_hbm [thread:$0]  %s121, 16, %s123, [#allocation9]
    $region25: #{tpu_custom_call.1} parent=1 // pred_fallthru
      _
    // Predicated region
    $region26: #{tpu_custom_call.1} parent=1 // pred_check
      _
    $region27: #{tpu_custom_call.1} parent=1 // pred_check_branch
      %127 = sbr.rel (0) target = $region29
    $region28: #{tpu_custom_call.1} parent=1 // pred_region
      %129 = vsyncadd [#allocation9], 0
      %s131 = sshll.u32 [#allocation10], 4
      %s132 = int_to_ptr.vmem [resolvable:$true] %s131
      %s133 = sshll.u32 %s4, 4
      %s134 = int_to_ptr.hbm [resolvable:$true] %s133
      %136 = dma.vmem_to_hbm [thread:$0]  %s132, 16, %s134, [#allocation9]
    $region29: #{tpu_custom_call.1} parent=1 // pred_fallthru
      _
    // Predicated region
    $region30: #{tpu_custom_call.1} parent=1 // pred_check
      _
    $region31: #{tpu_custom_call.1} parent=1 // pred_check_branch
      %138 = sbr.rel (0) target = $region33
    $region32: #{tpu_custom_call.1} parent=1 // pred_region
      %140 = dma.done [#allocation4], 128
    $region33: #{tpu_custom_call.1} parent=1 // pred_fallthru
      _
    // Predicated region
    $region34: #{tpu_custom_call.1} parent=1 // pred_check
      _
    $region35: #{tpu_custom_call.1} parent=1 // pred_check_branch
      %142 = sbr.rel (0) target = $region37
    $region36: #{tpu_custom_call.1} parent=1 // pred_region
      %144 = dma.done [#allocation9], 16
    $region37: #{tpu_custom_call.1} parent=1 // pred_fallthru
      _
    // Predicated region
    $region38: #{tpu_custom_call.1} parent=1 // pred_check
      _
    $region39: #{tpu_custom_call.1} parent=1 // pred_check_branch
      %146 = sbr.rel (0) target = $region41
    $region40: #{tpu_custom_call.1} parent=1 // pred_region
      %148 = dma.done [#allocation9], 16
    $region41: #{tpu_custom_call.1} parent=1 // pred_fallthru
      _
    %149 = vsyncpa [#allocation3], 1
    %150 = vsyncpa [#allocation6], 1
    %151 = vsyncpa [#allocation4], 1
    %152 = vsyncpa [#allocation9], 1

</llo_original>
